<compile_context>
chip_gen: v6e
topology: v6e:2x2x1
jax: 0.10.0
libtpu: 0.0.40
codegen_flags: <defaults>
</compile_context>

<pallas_src>
import functools

import jax
import jax.numpy as jnp
from jax import lax
from jax.experimental import pallas as pl
from jax.experimental.pallas import tpu as pltpu


def _projector_kernel(x_ref, w1_ref, b1_ref, w2_ref, b2_ref, o_ref, acc_ref,
                      *, block_k: int, n_chunks: int):
    # Load the batch tile once (bf16); reused by every hidden chunk.
    x = x_ref[...]
    # Fresh f32 accumulator for this batch tile.
    acc_ref[...] = jnp.zeros_like(acc_ref)

    def body(k, carry):
        k0 = pl.multiple_of(k * block_k, block_k)
        w1_c = w1_ref[:, pl.ds(k0, block_k)]          # (ft_dim, TK) bf16
        b1_c = b1_ref[:, pl.ds(k0, block_k)]          # (1, TK)      f32
        # First linear (MXU, bf16 x bf16 -> f32 accumulate) + bias + ReLU (VPU, f32).
        h = jnp.dot(x, w1_c, preferred_element_type=jnp.float32)
        h = jnp.maximum(h + b1_c, 0.0)
        # Second linear: accumulate this hidden chunk's contribution.
        w2_c = w2_ref[pl.ds(k0, block_k), :]          # (TK, bottleneck) bf16
        acc_ref[...] += jnp.dot(h.astype(w2_c.dtype), w2_c,
                                preferred_element_type=jnp.float32)
        return carry

    lax.fori_loop(0, n_chunks, body, None, unroll=(n_chunks <= 8))

    # Second bias (hoisted out of the chunk loop) + cast to output dtype.
    o_ref[...] = (acc_ref[...] + b2_ref[...]).astype(o_ref.dtype)


def simclr_projector(x, w1, b1, w2, b2, *, block_b=256, block_k=512,
                     compute_dtype=jnp.bfloat16):
    """x: (B, ft_dim); w1: (ft_dim, hidden); b1: (hidden,);
       w2: (hidden, bottleneck); b2: (bottleneck,). Returns (B, bottleneck)."""
    B, ft_dim = x.shape
    ft2, hidden = w1.shape
    hid2, bottleneck = w2.shape
    assert ft2 == ft_dim and hid2 == hidden
    out_dtype = x.dtype

    # --- batch tiling (sublane-aligned, pad B up to a multiple of the tile) ---
    tb = min(block_b, B)
    if tb >= 8:
        tb = (tb // 8) * 8
    b_pad = -(-B // tb) * tb
    if b_pad != B:
        x = jnp.pad(x, ((0, b_pad - B), (0, 0)))
    num_b_tiles = b_pad // tb

    # --- hidden-dim chunking for the fused two-matmul accumulation loop ---
    tk = min(block_k, hidden)
    if hidden % tk != 0 or tk % 128 != 0:
        tk = hidden                      # fall back to a single chunk
    n_chunks = hidden // tk

    # --- dtypes: bf16 MXU operands, f32 biases/accumulation ---
    x_c = x.astype(compute_dtype)
    w1_c = w1.astype(compute_dtype)
    w2_c = w2.astype(compute_dtype)
    b1_2d = b1.reshape(1, hidden).astype(jnp.float32)
    b2_2d = b2.reshape(1, bottleneck).astype(jnp.float32)

    # --- conservative VMEM budget (double-buffer everything + scratch) ---
    isz = jnp.dtype(compute_dtype).itemsize
    osz = jnp.dtype(out_dtype).itemsize
    est = 2 * (tb * ft_dim * isz              # x tile
               + ft_dim * hidden * isz        # w1 (resident)
               + hidden * 4                   # b1
               + hidden * bottleneck * isz    # w2 (resident)
               + bottleneck * 4               # b2
               + tb * bottleneck * osz)       # out tile
    est += tb * bottleneck * 4                # f32 accumulator scratch
    vmem_limit = min(max(int(est * 1.5) + (4 << 20), 32 << 20), 64 << 20)

    kernel = functools.partial(_projector_kernel, block_k=tk, n_chunks=n_chunks)

    out = pl.pallas_call(
        kernel,
        out_shape=jax.ShapeDtypeStruct((b_pad, bottleneck), out_dtype),
        grid_spec=pltpu.PrefetchScalarGridSpec(
            num_scalar_prefetch=0,
            grid=(num_b_tiles,),
            in_specs=[
                pl.BlockSpec((tb, ft_dim), lambda i: (i, 0)),          # x (streamed)
                pl.BlockSpec((ft_dim, hidden), lambda i: (0, 0)),      # w1 (resident)
                pl.BlockSpec((1, hidden), lambda i: (0, 0)),           # b1 (resident)
                pl.BlockSpec((hidden, bottleneck), lambda i: (0, 0)),  # w2 (resident)
                pl.BlockSpec((1, bottleneck), lambda i: (0, 0)),       # b2 (resident)
            ],
            out_specs=pl.BlockSpec((tb, bottleneck), lambda i: (i, 0)),
            scratch_shapes=[pltpu.VMEM((tb, bottleneck), jnp.float32)],
        ),
        compiler_params=pltpu.CompilerParams(
            dimension_semantics=("parallel",),   # batch tiles split across TCs on v7x
            vmem_limit_bytes=vmem_limit,
        ),
    )(x_c, w1_c, b1_2d, w2_c, b2_2d)

    if b_pad != B:
        out = out[:B]
    return out


def _reference(x, w1, b1, w2, b2, compute_dtype):
    # Reference that mimics the kernel's quantization (bf16 operands, f32
    # accumulation, bf16 re-cast of the activation) so the check stays tight.
    f32 = jnp.float32
    hp = lax.Precision.HIGHEST
    xq = x.astype(compute_dtype).astype(f32)
    w1q = w1.astype(compute_dtype).astype(f32)
    w2q = w2.astype(compute_dtype).astype(f32)
    h = jnp.maximum(jnp.dot(xq, w1q, precision=hp) + b1.astype(f32), 0.0)
    h = h.astype(compute_dtype).astype(f32)
    out = jnp.dot(h, w2q, precision=hp) + b2.astype(f32)
    return out.astype(x.dtype)


if __name__ == "__main__":
    # Small dims consistent with the module (ft_dim -> hidden -> bottleneck).
    B, FT_DIM, HIDDEN, BOTTLENECK = 8, 128, 256, 128

    key = jax.random.PRNGKey(0)
    kx, kw1, kb1, kw2, kb2 = jax.random.split(key, 5)

    x = jax.random.normal(kx, (B, FT_DIM), dtype=jnp.float32)
    # Deterministic synthetic parameters (nn.Linear-style scale), pre-transposed
    # to (in, out) so the kernel computes x @ W + b == torch's x @ W.T + b.
    w1 = jax.random.normal(kw1, (FT_DIM, HIDDEN), dtype=jnp.float32) * (1.0 / FT_DIM ** 0.5)
    b1 = jax.random.normal(kb1, (HIDDEN,), dtype=jnp.float32) * 0.01
    w2 = jax.random.normal(kw2, (HIDDEN, BOTTLENECK), dtype=jnp.float32) * (1.0 / HIDDEN ** 0.5)
    b2 = jax.random.normal(kb2, (BOTTLENECK,), dtype=jnp.float32) * 0.01

    out = jax.block_until_ready(simclr_projector(x, w1, b1, w2, b2))

    ref = _reference(x, w1, b1, w2, b2, jnp.bfloat16)
    assert out.shape == (B, BOTTLENECK)
    assert jnp.allclose(out, ref, atol=2e-3, rtol=2e-3), "mismatch vs reference"

    print("KERNEL_OK")
</pallas_src>

<mosaic_0001>
module attributes {stable_mosaic.version = 11 : i64} {
  func.func @_projector_kernel(%arg0: i32, %arg1: memref<8x128xbf16, #tpu.memory_space<vmem>>, %arg2: memref<128x256xbf16, #tpu.memory_space<vmem>>, %arg3: memref<1x256xf32, #tpu.memory_space<vmem>>, %arg4: memref<256x128xbf16, #tpu.memory_space<vmem>>, %arg5: memref<1x128xf32, #tpu.memory_space<vmem>>, %arg6: memref<8x128xf32, #tpu.memory_space<vmem>>, %arg7: memref<8x128xf32, #tpu.memory_space<vmem>>) attributes {dimension_semantics = [#tpu.dimension_semantics<parallel>], iteration_bounds = array<i64: 1>, scalar_prefetch = 0 : i64, scratch_operands = 1 : i64, tpu.core_type = #tpu.core_type<tc>, window_params = [{transform_indices = @transform_0, window_bounds = array<i64: 8, 128>}, {pipeline_mode = #tpu.pipeline_mode<synchronous>, transform_indices = @transform_1, window_bounds = array<i64: 128, 256>}, {pipeline_mode = #tpu.pipeline_mode<synchronous>, transform_indices = @transform_2, window_bounds = array<i64: 1, 256>}, {pipeline_mode = #tpu.pipeline_mode<synchronous>, transform_indices = @transform_3, window_bounds = array<i64: 256, 128>}, {pipeline_mode = #tpu.pipeline_mode<synchronous>, transform_indices = @transform_4, window_bounds = array<i64: 1, 128>}, {transform_indices = @transform_5, window_bounds = array<i64: 8, 128>}]} {
    %c0 = arith.constant 0 : index
    %c0_0 = arith.constant 0 : index
    %0 = vector.load %arg1[%c0, %c0_0] : memref<8x128xbf16, #tpu.memory_space<vmem>>, vector<8x128xbf16>
    %cst = arith.constant 0.000000e+00 : f32
    %1 = vector.broadcast %cst : f32 to vector<8x128xf32>
    %c0_1 = arith.constant 0 : index
    %c0_2 = arith.constant 0 : index
    %2 = vector.load %arg7[%c0_1, %c0_2] : memref<8x128xf32, #tpu.memory_space<vmem>>, vector<8x128xf32>
    tpu.vector_store %arg7[%c0_1, %c0_2], %1 {strides = array<i32>} : memref<8x128xf32, #tpu.memory_space<vmem>>, vector<8x128xf32>,
    %c0_i32 = arith.constant 0 : i32
    %c256_i32 = arith.constant 256 : i32
    %3 = arith.muli %c0_i32, %c256_i32 : i32
    %4 = tpu.assume_multiple %3, 256 : i32
    %c0_3 = arith.constant 0 : index
    %5 = arith.index_cast %4 : i32 to index
    %6 = vector.load %arg2[%c0_3, %5] : memref<128x256xbf16, #tpu.memory_space<vmem>>, vector<128x256xbf16>
    %c0_4 = arith.constant 0 : index
    %7 = arith.index_cast %4 : i32 to index
    %8 = vector.load %arg3[%c0_4, %7] : memref<1x256xf32, #tpu.memory_space<vmem>>, vector<1x256xf32>
    %cst_5 = arith.constant dense<0.000000e+00> : vector<8x256xf32>
    %9 = tpu.matmul %0, %6, %cst_5 {dimension_numbers = #tpu.dot_dimension_numbers<[1], [0], [0], [1], [0, 0, 1, 1], [], []>} : vector<8x128xbf16>, vector<128x256xbf16>, vector<8x256xf32> -> vector<8x256xf32>
    %10 = vector.broadcast %8 : vector<1x256xf32> to vector<8x256xf32>
    %11 = arith.addf %9, %10 : vector<8x256xf32>
    %cst_6 = arith.constant 0.000000e+00 : f32
    %12 = vector.broadcast %cst_6 : f32 to vector<8x256xf32>
    %13 = arith.maximumf %11, %12 : vector<8x256xf32>
    %14 = arith.index_cast %4 : i32 to index
    %c0_7 = arith.constant 0 : index
    %15 = vector.load %arg4[%14, %c0_7] : memref<256x128xbf16, #tpu.memory_space<vmem>>, vector<256x128xbf16>
    %c0_8 = arith.constant 0 : index
    %c0_9 = arith.constant 0 : index
    %16 = vector.load %arg7[%c0_8, %c0_9] : memref<8x128xf32, #tpu.memory_space<vmem>>, vector<8x128xf32>
    %17 = arith.truncf %13 : vector<8x256xf32> to vector<8x256xbf16>
    %cst_10 = arith.constant dense<0.000000e+00> : vector<8x128xf32>
    %18 = tpu.matmul %17, %15, %cst_10 {dimension_numbers = #tpu.dot_dimension_numbers<[1], [0], [0], [1], [0, 0, 1, 1], [], []>} : vector<8x256xbf16>, vector<256x128xbf16>, vector<8x128xf32> -> vector<8x128xf32>
    %19 = arith.addf %16, %18 : vector<8x128xf32>
    %c0_11 = arith.constant 0 : index
    %c0_12 = arith.constant 0 : index
    %20 = vector.load %arg7[%c0_11, %c0_12] : memref<8x128xf32, #tpu.memory_space<vmem>>, vector<8x128xf32>
    tpu.vector_store %arg7[%c0_11, %c0_12], %19 {strides = array<i32>} : memref<8x128xf32, #tpu.memory_space<vmem>>, vector<8x128xf32>,
    %c1_i32 = arith.constant 1 : i32
    %c0_13 = arith.constant 0 : index
    %c0_14 = arith.constant 0 : index
    %21 = vector.load %arg7[%c0_13, %c0_14] : memref<8x128xf32, #tpu.memory_space<vmem>>, vector<8x128xf32>
    %c0_15 = arith.constant 0 : index
    %c0_16 = arith.constant 0 : index
    %22 = vector.load %arg5[%c0_15, %c0_16] : memref<1x128xf32, #tpu.memory_space<vmem>>, vector<1x128xf32>
    %23 = vector.broadcast %22 : vector<1x128xf32> to vector<8x128xf32>
    %24 = arith.addf %21, %23 : vector<8x128xf32>
    %c0_17 = arith.constant 0 : index
    %c0_18 = arith.constant 0 : index
    %25 = vector.load %arg6[%c0_17, %c0_18] : memref<8x128xf32, #tpu.memory_space<vmem>>, vector<8x128xf32>
    tpu.vector_store %arg6[%c0_17, %c0_18], %24 {strides = array<i32>} : memref<8x128xf32, #tpu.memory_space<vmem>>, vector<8x128xf32>,
    return
  }
  func.func @transform_0(%arg0: i32) -> (i32, i32) {
    %c0_i32 = arith.constant 0 : i32
    %c0_i32_0 = arith.constant 0 : i32
    return %arg0, %c0_i32 : i32, i32
  }
  func.func @transform_1(%arg0: i32) -> (i32, i32) {
    %c0_i32 = arith.constant 0 : i32
    %c0_i32_0 = arith.constant 0 : i32
    %c0_i32_1 = arith.constant 0 : i32
    return %c0_i32, %c0_i32_0 : i32, i32
  }
  func.func @transform_2(%arg0: i32) -> (i32, i32) {
    %c0_i32 = arith.constant 0 : i32
    %c0_i32_0 = arith.constant 0 : i32
    %c0_i32_1 = arith.constant 0 : i32
    return %c0_i32, %c0_i32_0 : i32, i32
  }
  func.func @transform_3(%arg0: i32) -> (i32, i32) {
    %c0_i32 = arith.constant 0 : i32
    %c0_i32_0 = arith.constant 0 : i32
    %c0_i32_1 = arith.constant 0 : i32
    return %c0_i32, %c0_i32_0 : i32, i32
  }
  func.func @transform_4(%arg0: i32) -> (i32, i32) {
    %c0_i32 = arith.constant 0 : i32
    %c0_i32_0 = arith.constant 0 : i32
    %c0_i32_1 = arith.constant 0 : i32
    return %c0_i32, %c0_i32_0 : i32, i32
  }
  func.func @transform_5(%arg0: i32) -> (i32, i32) {
    %c0_i32 = arith.constant 0 : i32
    %c0_i32_0 = arith.constant 0 : i32
    return %arg0, %c0_i32 : i32, i32
  }
}

</mosaic_0001>

<llo_original>
// kernel: tpu_custom_call.1
$region0: #{tpu_custom_call.1}
  #allocation0 [shape = 'u32[]', space=smem, size = 0x4, offset = 0x4, fixed_abs, tag = 'smem constant byte address 0x4 - core index']
  #allocation1 [shape = 'u32[144,128]{1,0:T(1,128)}', space=vmem, size = 0x12000, scoped, tag = 'internal scratch']
  #allocation2 [shape = 'f32[8,128]{1,0:T(8,128)}', space=vmem, size = 0x1000, scoped, tag = 'scratch operand']
  %s0 = inlined_call_operand.hbm [shape: bf16[8,128], index: 0, kind: input, shape index: {}]
  %s1 = inlined_call_operand.hbm [shape: bf16[128,256], index: 1, kind: input, shape index: {}]
  %s2 = inlined_call_operand.vmem [shape: f32[1,256], index: 2, kind: input, shape index: {}]
  %s3 = inlined_call_operand.hbm [shape: bf16[256,128], index: 3, kind: input, shape index: {}]
  %s4 = inlined_call_operand.vmem [shape: f32[1,128], index: 4, kind: input, shape index: {}]
  %s5 = inlined_call_operand.hbm [shape: f32[8,128], index: 5, kind: output, shape index: {}]
  %s6 = sld [smem:[#allocation0]]
  $region42: #{tpu_custom_call.1} parent=0
    _
  %s8 = ssub.s32 1, %s6
  %s9 = scalar_select 0, %s8, %s6
  $region1: #{tpu_custom_call.1} parent=0
    #allocation3 [shape = 'u8[2048]{0}', space=vmem, size = 0x800, scoped, tag = 'input window, operand 0, single buffered']
    #allocation4 [shape = 's32[1]{0}', space=sflag, size = 0x4, scoped, tag = 'scoped memory for tpu_custom_call.1']
    #allocation5 [shape = 's32[1]{0}', space=sflag, size = 0x4, scoped, tag = 'scoped memory for tpu_custom_call.1']
    #allocation6 [shape = 'u8[65536]{0}', space=vmem, size = 0x10000, scoped, tag = 'input window, operand 1, single buffered']
    #allocation7 [shape = 's32[1]{0}', space=sflag, size = 0x4, scoped, tag = 'scoped memory for tpu_custom_call.1']
    #allocation8 [shape = 'u8[65536]{0}', space=vmem, size = 0x10000, scoped, tag = 'input window, operand 3, single buffered']
    #allocation9 [shape = 'u8[4096]{0}', space=vmem, size = 0x1000, scoped, tag = 'output window, operand 0, single buffered']
    %10 = vsyncpa [#allocation4], 0
    %11 = vsyncpa [#allocation7], 0
    %12 = vsyncpa [#allocation5], 0
    // Predicated region
    $region2: #{tpu_custom_call.1} parent=1 // pred_check
      _
    $region3: #{tpu_custom_call.1} parent=1 // pred_check_branch
      %14 = sbr.rel (0) target = $region5
    $region4: #{tpu_custom_call.1} parent=1 // pred_region
      %s16 = ssub.s32 64, 64
      %17 = vsyncadd [#allocation4], %s16
      %s19 = sshll.u32 [#allocation3], 4
      %s20 = int_to_ptr.vmem [resolvable:$true] %s19
      %22 = dma.hbm_to_vmem [thread:$0]  %s0, 64, %s20, [#allocation4]
    $region5: #{tpu_custom_call.1} parent=1 // pred_fallthru
      _
    // Predicated region
    $region6: #{tpu_custom_call.1} parent=1 // pred_check
      _
    $region7: #{tpu_custom_call.1} parent=1 // pred_check_branch
      %24 = sbr.rel (0) target = $region9
    $region8: #{tpu_custom_call.1} parent=1 // pred_region
      %s26 = ssub.s32 2048, 2048
      %27 = vsyncadd [#allocation7], %s26
      %s28 = sshll.u32 [#allocation6], 4
      %s29 = int_to_ptr.vmem [resolvable:$true] %s28
      %34 = dma.hbm_to_vmem [thread:$0]  %s1, 2048, %s29, [#allocation7], 128, 128, 8
    $region9: #{tpu_custom_call.1} parent=1 // pred_fallthru
      _
    // Predicated region
    $region10: #{tpu_custom_call.1} parent=1 // pred_check
      _
    $region11: #{tpu_custom_call.1} parent=1 // pred_check_branch
      %36 = sbr.rel (0) target = $region13
    $region12: #{tpu_custom_call.1} parent=1 // pred_region
      _
    $region13: #{tpu_custom_call.1} parent=1 // pred_fallthru
      _
    // Predicated region
    $region14: #{tpu_custom_call.1} parent=1 // pred_check
      _
    $region15: #{tpu_custom_call.1} parent=1 // pred_check_branch
      %38 = sbr.rel (0) target = $region17
    $region16: #{tpu_custom_call.1} parent=1 // pred_region
      %s40 = ssub.s32 2048, 2048
      %41 = vsyncadd [#allocation7], %s40
      %s42 = sshll.u32 [#allocation8], 4
      %s43 = int_to_ptr.vmem [resolvable:$true] %s42
      %48 = dma.hbm_to_vmem [thread:$0]  %s3, 2048, %s43, [#allocation7], 64, 64, 4
    $region17: #{tpu_custom_call.1} parent=1 // pred_fallthru
      _
    // Predicated region
    $region18: #{tpu_custom_call.1} parent=1 // pred_check
      _
    $region19: #{tpu_custom_call.1} parent=1 // pred_check_branch
      %50 = sbr.rel (0) target = $region21
    $region20: #{tpu_custom_call.1} parent=1 // pred_region
      _
    $region21: #{tpu_custom_call.1} parent=1 // pred_fallthru
      _
    // Predicated region
    $region22: #{tpu_custom_call.1} parent=1 // pred_check
      _
    $region23: #{tpu_custom_call.1} parent=1 // pred_check_branch
      %52 = sbr.rel (0) target = $region25
    $region24: #{tpu_custom_call.1} parent=1 // pred_region
      %53 = dma.done [#allocation4], 64
    $region25: #{tpu_custom_call.1} parent=1 // pred_fallthru
      _
    // Predicated region
    $region26: #{tpu_custom_call.1} parent=1 // pred_check
      _
    $region27: #{tpu_custom_call.1} parent=1 // pred_check_branch
      %55 = sbr.rel (0) target = $region29
    $region28: #{tpu_custom_call.1} parent=1 // pred_region
      %56 = dma.done [#allocation7], 2048
    $region29: #{tpu_custom_call.1} parent=1 // pred_fallthru
      _
    // Predicated region
    $region30: #{tpu_custom_call.1} parent=1 // pred_check
      _
    $region31: #{tpu_custom_call.1} parent=1 // pred_check_branch
      %58 = sbr.rel (0) target = $region33
    $region32: #{tpu_custom_call.1} parent=1 // pred_region
      %59 = dma.done [#allocation7], 2048
    $region33: #{tpu_custom_call.1} parent=1 // pred_fallthru
      _
    %v61 = vld [vmem:[#allocation3] sm:$0xf]
    %62 = vst [vmem:[#allocation2] sm:$0xff] 0.0
    %v63 = vld [vmem:[#allocation6] sm:$0xff]
    %v64 = vld [vmem:[#allocation6 + $0x8] sm:$0xff]
    %v65 = vld [vmem:[#allocation6 + $0x10] sm:$0xff]
    %v66 = vld [vmem:[#allocation6 + $0x18] sm:$0xff]
    %v67 = vld [vmem:[#allocation6 + $0x20] sm:$0xff]
    %v68 = vld [vmem:[#allocation6 + $0x28] sm:$0xff]
    %v69 = vld [vmem:[#allocation6 + $0x30] sm:$0xff]
    %v70 = vld [vmem:[#allocation6 + $0x38] sm:$0xff]
    %v71 = vld [vmem:[#allocation6 + $0x40] sm:$0xff]
    %v72 = vld [vmem:[#allocation6 + $0x48] sm:$0xff]
    %v73 = vld [vmem:[#allocation6 + $0x50] sm:$0xff]
    %v74 = vld [vmem:[#allocation6 + $0x58] sm:$0xff]
    %v75 = vld [vmem:[#allocation6 + $0x60] sm:$0xff]
    %v76 = vld [vmem:[#allocation6 + $0x68] sm:$0xff]
    %v77 = vld [vmem:[#allocation6 + $0x70] sm:$0xff]
    %v78 = vld [vmem:[#allocation6 + $0x78] sm:$0xff]
    %v79 = vld [vmem:[%s2] sm:$0x3]
    %v81 = vlaneseq
    %v82 = vshrl.u32 %v81, 7
    %v83 = vsub.s32 0, %v82
    %v84 = vrot.slane %v79, %v83
    %v85 = vlaneseq
    %v86 = vshrl.u32 %v85, 7
    %v87 = vsub.s32 1, %v86
    %v88 = vrot.slane %v79, %v87
    %v107 = vunpack.c.l.b16 %v63
    %v108 = vunpack.c.h.b16 %v63
    %v109 = vunpack.c.l.b16 %v64
    %v110 = vunpack.c.h.b16 %v64
    %v111 = vunpack.c.l.b16 %v65
    %v112 = vunpack.c.h.b16 %v65
    %v113 = vunpack.c.l.b16 %v66
    %v114 = vunpack.c.h.b16 %v66
    %v115 = vunpack.c.l.b16 %v67
    %v116 = vunpack.c.h.b16 %v67
    %v117 = vunpack.c.l.b16 %v68
    %v118 = vunpack.c.h.b16 %v68
    %v119 = vunpack.c.l.b16 %v69
    %v120 = vunpack.c.h.b16 %v69
    %v121 = vunpack.c.l.b16 %v70
    %v122 = vunpack.c.h.b16 %v70
    %v123 = vunpack.c.l.b16 %v71
    %v124 = vunpack.c.h.b16 %v71
    %v125 = vunpack.c.l.b16 %v72
    %v126 = vunpack.c.h.b16 %v72
    %v127 = vunpack.c.l.b16 %v73
    %v128 = vunpack.c.h.b16 %v73
    %v129 = vunpack.c.l.b16 %v74
    %v130 = vunpack.c.h.b16 %v74
    %v131 = vunpack.c.l.b16 %v75
    %v132 = vunpack.c.h.b16 %v75
    %v133 = vunpack.c.l.b16 %v76
    %v134 = vunpack.c.h.b16 %v76
    %v135 = vunpack.c.l.b16 %v77
    %v136 = vunpack.c.h.b16 %v77
    %v137 = vunpack.c.l.b16 %v78
    %v138 = vunpack.c.h.b16 %v78
    %v139 = vpack.c.b16 %v109, %v107
    %v140 = vpack.c.b16 %v110, %v108
    %v141 = vpack.c.b16 %v113, %v111
    %v142 = vpack.c.b16 %v114, %v112
    %v143 = vpack.c.b16 %v117, %v115
    %v144 = vpack.c.b16 %v118, %v116
    %v145 = vpack.c.b16 %v121, %v119
    %v146 = vpack.c.b16 %v122, %v120
    %v147 = vpack.c.b16 %v125, %v123
    %v148 = vpack.c.b16 %v126, %v124
    %v149 = vpack.c.b16 %v129, %v127
    %v150 = vpack.c.b16 %v130, %v128
    %v151 = vpack.c.b16 %v133, %v131
    %v152 = vpack.c.b16 %v134, %v132
    %v153 = vpack.c.b16 %v137, %v135
    %v154 = vpack.c.b16 %v138, %v136
    %171 = vmatprep.subr.bf16.mxu0 %v154
    %172 = vmatpush1.bf16.msra.mxu0 %v153
    %173 = vmatprep.subr.bf16.mxu0 %v152
    %174 = vmatpush1.bf16.msra.mxu0 %v151
    %175 = vmatprep.subr.bf16.mxu0 %v150
    %176 = vmatpush1.bf16.msra.mxu0 %v149
    %177 = vmatprep.subr.bf16.mxu0 %v148
    %178 = vmatpush1.bf16.msra.mxu0 %v147
    %179 = vmatprep.subr.bf16.mxu0 %v146
    %180 = vmatpush1.bf16.msra.mxu0 %v145
    %181 = vmatprep.subr.bf16.mxu0 %v144
    %182 = vmatpush1.bf16.msra.mxu0 %v143
    %183 = vmatprep.subr.bf16.mxu0 %v142
    %184 = vmatpush1.bf16.msra.mxu0 %v141
    %185 = vmatprep.subr.bf16.mxu0 %v140
    %186 = vmatpush1.bf16.msra.mxu0 %v139
    %187 = vmatprep.subr.bf16.mxu0 0
    %188 = vmatpush2.bf16.msra.mxu0 0
    %189 = vmatprep.subr.bf16.mxu0 0
    %190 = vmatpush2.bf16.msra.mxu0 0
    %191 = vmatprep.subr.bf16.mxu0 0
    %192 = vmatpush2.bf16.msra.mxu0 0
    %193 = vmatprep.subr.bf16.mxu0 0
    %194 = vmatpush2.bf16.msra.mxu0 0
    %195 = vmatprep.subr.bf16.mxu0 0
    %196 = vmatpush2.bf16.msra.mxu0 0
    %197 = vmatprep.subr.bf16.mxu0 0
    %198 = vmatpush2.bf16.msra.mxu0 0
    %199 = vmatprep.subr.bf16.mxu0 0
    %200 = vmatpush2.bf16.msra.mxu0 0
    %201 = vmatprep.subr.bf16.mxu0 0
    %202 = vmatpush2.bf16.msra.mxu0 0
    %203 = vmatprep.mubr.bf16.mxu0 0
    %204 = vmatmul.mubr.bf16.gmra.mxu0 %v61
    %v205 = vpop.f32.mrf.mxu0
    %v206 = vadd.f32 %v84, %v205
    %v207 = vpop.f32.mrf.mxu0
    %v208 = vadd.f32 %v88, %v207
    %v209 = vpop.f32.mrf.mxu0
    %v210 = vpop.f32.mrf.mxu0
    %211 = vdwg.mxu0
    %v212 = vmax.f32 %v206, 0.0
    %v213 = vmax.f32 %v208, 0.0
    %v214 = vld [vmem:[#allocation8] sm:$0xf]
    %v215 = vld [vmem:[#allocation8 + $0x4] sm:$0xf]
    %v216 = vld [vmem:[#allocation8 + $0x8] sm:$0xf]
    %v217 = vld [vmem:[#allocation8 + $0xc] sm:$0xf]
    %v218 = vld [vmem:[#allocation8 + $0x10] sm:$0xf]
    %v219 = vld [vmem:[#allocation8 + $0x14] sm:$0xf]
    %v220 = vld [vmem:[#allocation8 + $0x18] sm:$0xf]
    %v221 = vld [vmem:[#allocation8 + $0x1c] sm:$0xf]
    %v222 = vld [vmem:[#allocation8 + $0x20] sm:$0xf]
    %v223 = vld [vmem:[#allocation8 + $0x24] sm:$0xf]
    %v224 = vld [vmem:[#allocation8 + $0x28] sm:$0xf]
    %v225 = vld [vmem:[#allocation8 + $0x2c] sm:$0xf]
    %v226 = vld [vmem:[#allocation8 + $0x30] sm:$0xf]
    %v227 = vld [vmem:[#allocation8 + $0x34] sm:$0xf]
    %v228 = vld [vmem:[#allocation8 + $0x38] sm:$0xf]
    %v229 = vld [vmem:[#allocation8 + $0x3c] sm:$0xf]
    %v230 = vld [vmem:[#allocation8 + $0x40] sm:$0xf]
    %v231 = vld [vmem:[#allocation8 + $0x44] sm:$0xf]
    %v232 = vld [vmem:[#allocation8 + $0x48] sm:$0xf]
    %v233 = vld [vmem:[#allocation8 + $0x4c] sm:$0xf]
    %v234 = vld [vmem:[#allocation8 + $0x50] sm:$0xf]
    %v235 = vld [vmem:[#allocation8 + $0x54] sm:$0xf]
    %v236 = vld [vmem:[#allocation8 + $0x58] sm:$0xf]
    %v237 = vld [vmem:[#allocation8 + $0x5c] sm:$0xf]
    %v238 = vld [vmem:[#allocation8 + $0x60] sm:$0xf]
    %v239 = vld [vmem:[#allocation8 + $0x64] sm:$0xf]
    %v240 = vld [vmem:[#allocation8 + $0x68] sm:$0xf]
    %v241 = vld [vmem:[#allocation8 + $0x6c] sm:$0xf]
    %v242 = vld [vmem:[#allocation8 + $0x70] sm:$0xf]
    %v243 = vld [vmem:[#allocation8 + $0x74] sm:$0xf]
    %v244 = vld [vmem:[#allocation8 + $0x78] sm:$0xf]
    %v245 = vld [vmem:[#allocation8 + $0x7c] sm:$0xf]
    %v246 = vld [vmem:[#allocation2] sm:$0xff]
    %v247 = vpack.c.bf16 %v212, %v212
    %v248 = vpack.c.bf16 %v213, %v213
    %v281 = vunpack.c.l.b16 %v214
    %v282 = vunpack.c.l.b16 %v215
    %v283 = vunpack.c.l.b16 %v216
    %v284 = vunpack.c.l.b16 %v217
    %v285 = vunpack.c.l.b16 %v218
    %v286 = vunpack.c.l.b16 %v219
    %v287 = vunpack.c.l.b16 %v220
    %v288 = vunpack.c.l.b16 %v221
    %v289 = vunpack.c.l.b16 %v222
    %v290 = vunpack.c.l.b16 %v223
    %v291 = vunpack.c.l.b16 %v224
    %v292 = vunpack.c.l.b16 %v225
    %v293 = vunpack.c.l.b16 %v226
    %v294 = vunpack.c.l.b16 %v227
    %v295 = vunpack.c.l.b16 %v228
    %v296 = vunpack.c.l.b16 %v229
    %v297 = vunpack.c.l.b16 %v230
    %v298 = vunpack.c.l.b16 %v231
    %v299 = vunpack.c.l.b16 %v232
    %v300 = vunpack.c.l.b16 %v233
    %v301 = vunpack.c.l.b16 %v234
    %v302 = vunpack.c.l.b16 %v235
    %v303 = vunpack.c.l.b16 %v236
    %v304 = vunpack.c.l.b16 %v237
    %v305 = vunpack.c.l.b16 %v238
    %v306 = vunpack.c.l.b16 %v239
    %v307 = vunpack.c.l.b16 %v240
    %v308 = vunpack.c.l.b16 %v241
    %v309 = vunpack.c.l.b16 %v242
    %v310 = vunpack.c.l.b16 %v243
    %v311 = vunpack.c.l.b16 %v244
    %v312 = vunpack.c.l.b16 %v245
    %v313 = vpack.c.b16 %v282, %v281
    %v314 = vpack.c.b16 %v284, %v283
    %v315 = vpack.c.b16 %v286, %v285
    %v316 = vpack.c.b16 %v288, %v287
    %v317 = vpack.c.b16 %v290, %v289
    %v318 = vpack.c.b16 %v292, %v291
    %v319 = vpack.c.b16 %v294, %v293
    %v320 = vpack.c.b16 %v296, %v295
    %v321 = vpack.c.b16 %v298, %v297
    %v322 = vpack.c.b16 %v300, %v299
    %v323 = vpack.c.b16 %v302, %v301
    %v324 = vpack.c.b16 %v304, %v303
    %v325 = vpack.c.b16 %v306, %v305
    %v326 = vpack.c.b16 %v308, %v307
    %v327 = vpack.c.b16 %v310, %v309
    %v328 = vpack.c.b16 %v312, %v311
    %345 = vmatprep.subr.bf16.mxu0 0
    %346 = vmatpush1.bf16.msra.mxu0 %v320
    %347 = vmatprep.subr.bf16.mxu0 0
    %348 = vmatpush1.bf16.msra.mxu0 %v319
    %349 = vmatprep.subr.bf16.mxu0 0
    %350 = vmatpush1.bf16.msra.mxu0 %v318
    %351 = vmatprep.subr.bf16.mxu0 0
    %352 = vmatpush1.bf16.msra.mxu0 %v317
    %353 = vmatprep.subr.bf16.mxu0 0
    %354 = vmatpush1.bf16.msra.mxu0 %v316
    %355 = vmatprep.subr.bf16.mxu0 0
    %356 = vmatpush1.bf16.msra.mxu0 %v315
    %357 = vmatprep.subr.bf16.mxu0 0
    %358 = vmatpush1.bf16.msra.mxu0 %v314
    %359 = vmatprep.subr.bf16.mxu0 0
    %360 = vmatpush1.bf16.msra.mxu0 %v313
    %361 = vmatprep.subr.bf16.mxu0 0
    %362 = vmatpush2.bf16.msra.mxu0 %v328
    %363 = vmatprep.subr.bf16.mxu0 0
    %364 = vmatpush2.bf16.msra.mxu0 %v327
    %365 = vmatprep.subr.bf16.mxu0 0
    %366 = vmatpush2.bf16.msra.mxu0 %v326
    %367 = vmatprep.subr.bf16.mxu0 0
    %368 = vmatpush2.bf16.msra.mxu0 %v325
    %369 = vmatprep.subr.bf16.mxu0 0
    %370 = vmatpush2.bf16.msra.mxu0 %v324
    %371 = vmatprep.subr.bf16.mxu0 0
    %372 = vmatpush2.bf16.msra.mxu0 %v323
    %373 = vmatprep.subr.bf16.mxu0 0
    %374 = vmatpush2.bf16.msra.mxu0 %v322
    %375 = vmatprep.subr.bf16.mxu0 0
    %376 = vmatpush2.bf16.msra.mxu0 %v321
    %377 = vmatprep.mubr.bf16.mxu0 %v248
    %378 = vmatmul.mubr.bf16.gmra.mxu0 %v247
    %v379 = vpop.f32.mrf.mxu0
    %v380 = vadd.f32 0.0, %v379
    %v381 = vpop.f32.mrf.mxu0
    %v382 = vpop.f32.mrf.mxu0
    %v383 = vpop.f32.mrf.mxu0
    %384 = vdwg.mxu0
    %v385 = vadd.f32 %v246, %v380
    %386 = vst [vmem:[#allocation2] sm:$0xff] %v385
    %v387 = vld [vmem:[#allocation2] sm:$0xff]
    %v388 = vld [vmem:[%s4] sm:$0x1]
    %v390 = vlaneseq
    %v391 = vshrl.u32 %v390, 7
    %v392 = vsub.s32 0, %v391
    %v393 = vrot.slane %v388, %v392
    %v395 = vadd.f32 %v387, %v393
    %396 = vst [vmem:[#allocation9] sm:$0xff] %v395
    // Predicated region
    $region34: #{tpu_custom_call.1} parent=1 // pred_check
      _
    $region35: #{tpu_custom_call.1} parent=1 // pred_check_branch
      %398 = sbr.rel (0) target = $region37
    $region36: #{tpu_custom_call.1} parent=1 // pred_region
      %s400 = ssub.s32 128, 128
      %401 = vsyncadd [#allocation5], %s400
      %s403 = sshll.u32 [#allocation9], 4
      %s404 = int_to_ptr.vmem [resolvable:$true] %s403
      %406 = dma.vmem_to_hbm [thread:$0]  %s404, 128, %s5, [#allocation5]
    $region37: #{tpu_custom_call.1} parent=1 // pred_fallthru
      _
    // Predicated region
    $region38: #{tpu_custom_call.1} parent=1 // pred_check
      _
    $region39: #{tpu_custom_call.1} parent=1 // pred_check_branch
      %408 = sbr.rel (0) target = $region41
    $region40: #{tpu_custom_call.1} parent=1 // pred_region
      %409 = dma.done [#allocation5], 128
    $region41: #{tpu_custom_call.1} parent=1 // pred_fallthru
      _
    %410 = vsyncpa [#allocation4], 1
    %411 = vsyncpa [#allocation7], 1
    %412 = vsyncpa [#allocation5], 1

</llo_original>
